<compile_context>
chip_gen: v7x
topology: tpu7x:2x2x1
jax: 0.10.0
libtpu: 0.0.40
codegen_flags: <defaults>
</compile_context>

<pallas_src>
import math
import functools

import jax
import jax.numpy as jnp
from jax.experimental import pallas as pl
from jax.experimental.pallas import tpu as pltpu


# ---------------------------------------------------------------------------
# Pallas kernel
# ---------------------------------------------------------------------------
def token_embedding_kernel(xp_ref, w_ref, out_ref):
    """Circular Conv1d (k=3) for one batch element, as 3 accumulating MXU dots.

    xp_ref : (1, L+2, C) bf16 -- halo-padded inputs [x_{L-1} | x_0 .. x_{L-1} | x_0]
    w_ref  : (3C, Mp)    bf16 -- packed weights, rows = tap0 | tap1 | tap2 (resident)
    out_ref: (1, L, Mp)  f32  -- lane-dense (Mp is a multiple of 128)
    """
    L = out_ref.shape[1]
    C = xp_ref.shape[2]

    # Static offset slices of the padded ref give the three circular taps directly.
    x_tm1 = xp_ref[0, 0:L, :]          # x[t-1] (wrapped)
    x_t   = xp_ref[0, 1:L + 1, :]      # x[t]
    x_tp1 = xp_ref[0, 2:L + 2, :]      # x[t+1] (wrapped)

    acc = jnp.dot(x_tm1, w_ref[0:C, :], preferred_element_type=jnp.float32)
    acc += jnp.dot(x_t, w_ref[C:2 * C, :], preferred_element_type=jnp.float32)
    acc += jnp.dot(x_tp1, w_ref[2 * C:3 * C, :], preferred_element_type=jnp.float32)

    out_ref[0, :, :] = acc.astype(out_ref.dtype)


# ---------------------------------------------------------------------------
# Parameter init / packing (done once, outside the jitted forward)
# ---------------------------------------------------------------------------
def init_conv_weight(key, c_in, embedding_size):
    """Conv1d weight (M, C, 3), kaiming_normal_(fan_in, leaky_relu a=0.01) like PyTorch."""
    fan_in = c_in * 3
    gain = math.sqrt(2.0 / (1.0 + 0.01 ** 2))
    std = gain / math.sqrt(fan_in)
    return std * jax.random.normal(key, (embedding_size, c_in, 3), jnp.float32)


def pack_conv_weight(w_conv, lane_multiple=128):
    """(M, C, 3) PyTorch Conv1d weight -> (3C, Mp) bf16 packed matmul weight.

    Row block k multiplies the channels of x[t + k - 1] (circular).  Mp is M rounded up
    to a multiple of 128 (zero columns) so the kernel's output stores are lane-dense.
    """
    m, c, k = w_conv.shape
    assert k == 3
    w = jnp.concatenate(
        [w_conv[:, :, 0].T, w_conv[:, :, 1].T, w_conv[:, :, 2].T], axis=0
    )  # (3C, M)
    mp = ((m + lane_multiple - 1) // lane_multiple) * lane_multiple
    if mp != m:
        w = jnp.pad(w, ((0, 0), (0, mp - m)))
    return w.astype(jnp.bfloat16)


# ---------------------------------------------------------------------------
# Forward wrapper
# ---------------------------------------------------------------------------
@functools.partial(jax.jit, static_argnums=2)
def token_embedding_forward(x, w_packed, embedding_size):
    """x: (B, L, C) f32, w_packed: (3C, Mp) bf16 -> (B, L, embedding_size) f32."""
    B, L, C = x.shape
    threeC, Mp = w_packed.shape
    assert threeC == 3 * C

    # Circular halo (one row each side) fused with the bf16 cast: the only wrapper op.
    # The wrap is fully contained inside each batch's kernel tile, so no cross-tile
    # halo handling is needed.
    x_pad = jnp.concatenate([x[:, -1:, :], x, x[:, :1, :]], axis=1).astype(jnp.bfloat16)

    # Per-step VMEM: double-buffered x/out tiles + resident weights.  Tiny at these
    # shapes; only raise the scoped limit (with headroom) when the tiles demand it,
    # keeping v5e's 16 MiB / v6e-v7x's 32 MiB defaults otherwise.
    tile_bytes = 2 * (L + 2) * C * 2 + 2 * L * Mp * 4 + threeC * Mp * 2
    cp_kwargs = dict(dimension_semantics=("parallel",))
    if tile_bytes > 12 * 1024 * 1024:
        cp_kwargs["vmem_limit_bytes"] = min(int(tile_bytes * 3), 48 * 1024 * 1024)

    out = pl.pallas_call(
        token_embedding_kernel,
        out_shape=jax.ShapeDtypeStruct((B, L, Mp), jnp.float32),
        grid_spec=pltpu.PrefetchScalarGridSpec(
            num_scalar_prefetch=0,
            grid=(B,),
            in_specs=[
                pl.BlockSpec((1, L + 2, C), lambda b: (b, 0, 0)),
                pl.BlockSpec((threeC, Mp), lambda b: (0, 0)),  # weights stay resident
            ],
            out_specs=pl.BlockSpec((1, L, Mp), lambda b: (b, 0, 0)),
        ),
        compiler_params=pltpu.CompilerParams(**cp_kwargs),
    )(x_pad, w_packed)

    if Mp != embedding_size:
        out = out[:, :, :embedding_size]
    return out


# Pure-JAX reference (mirrors the PyTorch circular Conv1d) for sanity checks.
def token_embedding_reference(x, w_conv):
    x_m1 = jnp.roll(x, 1, axis=1)
    x_p1 = jnp.roll(x, -1, axis=1)
    return (jnp.einsum("blc,mc->blm", x_m1, w_conv[:, :, 0])
            + jnp.einsum("blc,mc->blm", x, w_conv[:, :, 1])
            + jnp.einsum("blc,mc->blm", x_p1, w_conv[:, :, 2]))


if __name__ == "__main__":
    key = jax.random.PRNGKey(0)
    k_w, k_x = jax.random.split(key)

    B, L, c_in, embedding_size = 2, 16, 4, 32

    w_conv = init_conv_weight(k_w, c_in, embedding_size)   # (M, C, 3), PyTorch layout
    w_packed = pack_conv_weight(w_conv)                     # (3C, 128) bf16, packed once

    x = jax.random.normal(k_x, (B, L, c_in), jnp.float32)   # module input (B, L, C)

    out = token_embedding_forward(x, w_packed, embedding_size)
    jax.block_until_ready(out)

    assert out.shape == (B, L, embedding_size), out.shape
    assert out.dtype == jnp.float32

    # Tight check against a reference that uses the same bf16-rounded operands
    # (isolates kernel correctness from the intentional bf16 quantization).
    x_bf = x.astype(jnp.bfloat16).astype(jnp.float32)
    w_bf = w_conv.astype(jnp.bfloat16).astype(jnp.float32)
    ref_bf = token_embedding_reference(x_bf, w_bf)
    err_bf = float(jnp.max(jnp.abs(out - ref_bf)))
    assert jnp.allclose(out, ref_bf, atol=1e-3, rtol=1e-3), err_bf

    # Loose sanity check against the full-f32 PyTorch-equivalent math.
    ref_f32 = token_embedding_reference(x, w_conv)
    err_f32 = float(jnp.max(jnp.abs(out - ref_f32)))
    assert jnp.allclose(out, ref_f32, atol=5e-2, rtol=5e-2), err_f32

    print("KERNEL_OK")
</pallas_src>

<mosaic_0001>
module attributes {stable_mosaic.version = 11 : i64} {
  func.func @token_embedding_kernel(%arg0: i32, %arg1: memref<1x18x4xbf16, #tpu.memory_space<vmem>>, %arg2: memref<12x128xbf16, #tpu.memory_space<vmem>>, %arg3: memref<1x16x128xf32, #tpu.memory_space<vmem>>) attributes {dimension_semantics = [#tpu.dimension_semantics<parallel>], iteration_bounds = array<i64: 2>, scalar_prefetch = 0 : i64, scratch_operands = 0 : i64, tpu.core_type = #tpu.core_type<tc>, window_params = [{transform_indices = @transform_0, window_bounds = array<i64: 1, 18, 4>}, {pipeline_mode = #tpu.pipeline_mode<synchronous>, transform_indices = @transform_1, window_bounds = array<i64: 12, 128>}, {transform_indices = @transform_2, window_bounds = array<i64: 1, 16, 128>}]} {
    %c0 = arith.constant 0 : index
    %c0_0 = arith.constant 0 : index
    %c0_1 = arith.constant 0 : index
    %0 = vector.load %arg1[%c0, %c0_0, %c0_1] : memref<1x18x4xbf16, #tpu.memory_space<vmem>>, vector<1x16x4xbf16>
    %1 = vector.shape_cast %0 : vector<1x16x4xbf16> to vector<16x4xbf16>
    %c0_2 = arith.constant 0 : index
    %c1 = arith.constant 1 : index
    %c0_3 = arith.constant 0 : index
    %2 = vector.load %arg1[%c0_2, %c1, %c0_3] : memref<1x18x4xbf16, #tpu.memory_space<vmem>>, vector<1x16x4xbf16>
    %3 = vector.shape_cast %2 : vector<1x16x4xbf16> to vector<16x4xbf16>
    %c0_4 = arith.constant 0 : index
    %c2 = arith.constant 2 : index
    %c0_5 = arith.constant 0 : index
    %4 = vector.load %arg1[%c0_4, %c2, %c0_5] : memref<1x18x4xbf16, #tpu.memory_space<vmem>>, vector<1x16x4xbf16>
    %5 = vector.shape_cast %4 : vector<1x16x4xbf16> to vector<16x4xbf16>
    %c0_6 = arith.constant 0 : index
    %c0_7 = arith.constant 0 : index
    %6 = vector.load %arg2[%c0_6, %c0_7] : memref<12x128xbf16, #tpu.memory_space<vmem>>, vector<4x128xbf16>
    %cst = arith.constant dense<0.000000e+00> : vector<16x128xf32>
    %7 = tpu.matmul %1, %6, %cst {dimension_numbers = #tpu.dot_dimension_numbers<[1], [0], [0], [1], [0, 0, 1, 1], [], []>} : vector<16x4xbf16>, vector<4x128xbf16>, vector<16x128xf32> -> vector<16x128xf32>
    %c4 = arith.constant 4 : index
    %c0_8 = arith.constant 0 : index
    %8 = vector.load %arg2[%c4, %c0_8] : memref<12x128xbf16, #tpu.memory_space<vmem>>, vector<4x128xbf16>
    %cst_9 = arith.constant dense<0.000000e+00> : vector<16x128xf32>
    %9 = tpu.matmul %3, %8, %cst_9 {dimension_numbers = #tpu.dot_dimension_numbers<[1], [0], [0], [1], [0, 0, 1, 1], [], []>} : vector<16x4xbf16>, vector<4x128xbf16>, vector<16x128xf32> -> vector<16x128xf32>
    %10 = arith.addf %7, %9 : vector<16x128xf32>
    %c8 = arith.constant 8 : index
    %c0_10 = arith.constant 0 : index
    %11 = vector.load %arg2[%c8, %c0_10] : memref<12x128xbf16, #tpu.memory_space<vmem>>, vector<4x128xbf16>
    %cst_11 = arith.constant dense<0.000000e+00> : vector<16x128xf32>
    %12 = tpu.matmul %5, %11, %cst_11 {dimension_numbers = #tpu.dot_dimension_numbers<[1], [0], [0], [1], [0, 0, 1, 1], [], []>} : vector<16x4xbf16>, vector<4x128xbf16>, vector<16x128xf32> -> vector<16x128xf32>
    %13 = arith.addf %10, %12 : vector<16x128xf32>
    %c0_12 = arith.constant 0 : index
    %c0_13 = arith.constant 0 : index
    %c0_14 = arith.constant 0 : index
    %14 = vector.load %arg3[%c0_12, %c0_13, %c0_14] : memref<1x16x128xf32, #tpu.memory_space<vmem>>, vector<1x16x128xf32>
    %15 = vector.shape_cast %14 : vector<1x16x128xf32> to vector<16x128xf32>
    %16 = vector.shape_cast %13 : vector<16x128xf32> to vector<1x16x128xf32>
    tpu.vector_store %arg3[%c0_12, %c0_13, %c0_14], %16 {strides = array<i32>} : memref<1x16x128xf32, #tpu.memory_space<vmem>>, vector<1x16x128xf32>,
    return
  }
  func.func @transform_0(%arg0: i32) -> (i32, i32, i32) {
    %c0_i32 = arith.constant 0 : i32
    %c0_i32_0 = arith.constant 0 : i32
    %c0_i32_1 = arith.constant 0 : i32
    return %arg0, %c0_i32, %c0_i32_0 : i32, i32, i32
  }
  func.func @transform_1(%arg0: i32) -> (i32, i32) {
    %c0_i32 = arith.constant 0 : i32
    %c0_i32_0 = arith.constant 0 : i32
    %c0_i32_1 = arith.constant 0 : i32
    return %c0_i32, %c0_i32_0 : i32, i32
  }
  func.func @transform_2(%arg0: i32) -> (i32, i32, i32) {
    %c0_i32 = arith.constant 0 : i32
    %c0_i32_0 = arith.constant 0 : i32
    %c0_i32_1 = arith.constant 0 : i32
    return %arg0, %c0_i32, %c0_i32_0 : i32, i32, i32
  }
}

</mosaic_0001>

<llo_original>
// kernel: token_embedding_forward.1
$region0: #{token_embedding_forward.1}
  #allocation0 [shape = 'u32[]', space=smem, size = 0x4, offset = 0x4, fixed_abs, tag = 'smem constant byte address 0x4 - core index']
  #allocation1 [shape = 'u32[144,128]{1,0:T(1,128)}', space=vmem, size = 0x12000, scoped, tag = 'internal scratch']
  %s0 = inlined_call_operand.vmem [shape: bf16[2,18,4], index: 0, kind: input, shape index: {}]
  %s1 = inlined_call_operand.vmem [shape: bf16[12,128], index: 1, kind: input, shape index: {}]
  %s2 = inlined_call_operand.hbm [shape: f32[2,16,128], index: 2, kind: output, shape index: {}]
  %s3 = sld [smem:[#allocation0]]
  $region41: #{token_embedding_forward.1} parent=0
    _
  %s5 = ssub.s32 1, %s3
  %s6 = scalar_select 0, %s5, %s3
  $region1: #{token_embedding_forward.1} parent=0
    #allocation2 [shape = 'u8[16384]{0}', space=vmem, size = 0x4000, scoped, tag = 'output window, operand 0']
    #allocation3 [shape = 's32[2]{0}', space=sflag, size = 0x8, scoped, tag = 'scoped memory for token_embedding_forward.1']
    %7 = vsyncpa [#allocation3], 0
    %s8 = scalar_lea.sflag [#allocation3], 1
    %9 = vsyncpa %s8, 0
    loop: start=0, step=1, limit=4
    $region2: #{token_embedding_forward.1} parent=1 // loop_pre_header
      _
    $region3: #{token_embedding_forward.1} parent=1 // loop_header
      %s11 = sphi 0, %s15
      %p12 = scmp.ge.s32.totalorder %s11, 4
      %s21 = sphi 0, %s23
      %s24 = sphi 0, %s21
      %s25 = sphi 0, %s24
      %s41 = sphi 0, %s25
      %s45 = sphi 0, %s45
      %s47 = sphi 0, %s45
      %s48 = sphi 0, %s47
      %s62 = sphi 0, %s48
      %s68 = sphi 0, %s70
      %s71 = sphi 0, %s68
      %s72 = sphi 0, %s71
      %s88 = sphi 0, %s72
    $region4: #{token_embedding_forward.1} parent=1 // loop_header_branch
      %14 = sbr.rel (%p12) target = $region8
    $region5: #{token_embedding_forward.1} parent=1 // loop_body
      %s16 = ssub.s32 %s11, 1
      %s17 = ssub.s32 %s11, 2
      %s18 = sadd.s32 %s11, 1
      %s19 = ssub.s32 %s11, %s18
      %p20 = scmp.eq.s32.totalorder %s19, 0
      %s22 = sadd.s32 %s21, 1
      %s23 = scalar_select %p20, %s21, %s22
      %p26 = pneg %p20
      %p27 = scmp.eq.s32.totalorder %s11, 1
      %p28 = por %p26, %p27
      %p29 = scmp.ne.s32.totalorder %s21, %s24
      %p30 = scmp.eq.s32.totalorder %s11, 0
      %p31 = por %p29, %p30
      %p32 = scmp.ne.s32.totalorder %s21, %s24
      %p33 = scmp.eq.s32.totalorder %s16, 1
      %p34 = por %p32, %p33
      %p35 = scmp.ne.s32.totalorder %s24, %s25
      %p36 = scmp.eq.s32.totalorder %s16, 0
      %p37 = por %p35, %p36
      %p38 = scmp.ne.s32.totalorder %s24, %s25
      %p39 = scmp.eq.s32.totalorder %s17, 1
      %p40 = por %p38, %p39
      %p42 = scmp.ne.s32.totalorder %s25, %s41
      %p43 = scmp.eq.s32.totalorder %s17, 0
      %p44 = por %p42, %p43
      %s46 = sadd.s32 %s45, 1
      %p49 = scmp.eq.s32.totalorder %s11, 1
      %p50 = scmp.ne.s32.totalorder %s45, %s47
      %p51 = scmp.eq.s32.totalorder %s11, 0
      %p52 = por %p50, %p51
      %p53 = scmp.ne.s32.totalorder %s45, %s47
      %p54 = scmp.eq.s32.totalorder %s16, 1
      %p55 = por %p53, %p54
      %p56 = scmp.ne.s32.totalorder %s47, %s48
      %p57 = scmp.eq.s32.totalorder %s16, 0
      %p58 = por %p56, %p57
      %p59 = scmp.ne.s32.totalorder %s47, %s48
      %p60 = scmp.eq.s32.totalorder %s17, 1
      %p61 = por %p59, %p60
      %p63 = scmp.ne.s32.totalorder %s48, %s62
      %p64 = scmp.eq.s32.totalorder %s17, 0
      %p65 = por %p63, %p64
      %s66 = ssub.s32 %s11, %s18
      %p67 = scmp.eq.s32.totalorder %s66, 0
      %s69 = sadd.s32 %s68, 1
      %s70 = scalar_select %p67, %s68, %s69
      %p73 = pneg %p67
      %p74 = scmp.eq.s32.totalorder %s11, 1
      %p75 = por %p73, %p74
      %p76 = scmp.ne.s32.totalorder %s68, %s71
      %p77 = scmp.eq.s32.totalorder %s11, 0
      %p78 = por %p76, %p77
      %p79 = scmp.ne.s32.totalorder %s68, %s71
      %p80 = scmp.eq.s32.totalorder %s16, 1
      %p81 = por %p79, %p80
      %p82 = scmp.ne.s32.totalorder %s71, %s72
      %p83 = scmp.eq.s32.totalorder %s16, 0
      %p84 = por %p82, %p83
      %p85 = scmp.ne.s32.totalorder %s71, %s72
      %p86 = scmp.eq.s32.totalorder %s17, 1
      %p87 = por %p85, %p86
      %p89 = scmp.ne.s32.totalorder %s72, %s88
      %p90 = scmp.eq.s32.totalorder %s17, 0
      %p91 = por %p89, %p90
      %p92 = scmp.le.s32.totalorder 1, %s11
      %p93 = scmp.lt.s32.totalorder %s11, 3
      %p94 = pnand %p92, %p93
      %p95 = pneg %p94
      // Predicated region
      $region9: #{token_embedding_forward.1} parent=5 // pred_check
        _
      $region10: #{token_embedding_forward.1} parent=5 // pred_check_branch
        %97 = sbr.rel (%p94) target = $region12
      $region11: #{token_embedding_forward.1} parent=5 // pred_region
        %s98 = ssub.s32 %s11, 1
        // Predicated region
        $region13: #{token_embedding_forward.1} parent=11 // pred_check
          %p99 = pneg %p58
        $region14: #{token_embedding_forward.1} parent=11 // pred_check_branch
          %101 = sbr.rel (%p99) target = $region16
        $region15: #{token_embedding_forward.1} parent=11 // pred_region
          _
        $region16: #{token_embedding_forward.1} parent=11 // pred_fallthru
          _
      $region12: #{token_embedding_forward.1} parent=5 // pred_fallthru
        _
      %p102 = scmp.lt.s32.totalorder %s11, 2
      // Predicated region
      $region17: #{token_embedding_forward.1} parent=5 // pred_check
        %p103 = pneg %p102
      $region18: #{token_embedding_forward.1} parent=5 // pred_check_branch
        %105 = sbr.rel (%p103) target = $region20
      $region19: #{token_embedding_forward.1} parent=5 // pred_region
        // Predicated region
        $region21: #{token_embedding_forward.1} parent=19 // pred_check
          %p106 = pneg %p31
        $region22: #{token_embedding_forward.1} parent=19 // pred_check_branch
          %108 = sbr.rel (%p106) target = $region24
        $region23: #{token_embedding_forward.1} parent=19 // pred_region
          %p109 = scmp.lt.s32.totalorder %s11, 1
          %s110 = scalar_select %p109, %s11, 1
          %s111 = smul.addr %s110, 3
          %s112 = smul.addr %s111, 4
          %s113 = scalar_lea.vmem %s0, %s112
        $region24: #{token_embedding_forward.1} parent=19 // pred_fallthru
          _
      $region20: #{token_embedding_forward.1} parent=5 // pred_fallthru
        _
      %p114 = scmp.le.s32.totalorder 1, %s11
      %p115 = scmp.lt.s32.totalorder %s11, 3
      %p116 = pnand %p114, %p115
      %p117 = pneg %p116
      // Predicated region
      $region25: #{token_embedding_forward.1} parent=5 // pred_check
        _
      $region26: #{token_embedding_forward.1} parent=5 // pred_check_branch
        %119 = sbr.rel (%p116) target = $region28
      $region27: #{token_embedding_forward.1} parent=5 // pred_region
        %s120 = ssub.s32 %s11, 1
        %p121 = scmp.lt.s32.totalorder %s16, 1
        %s122 = scalar_select %p121, %s16, 1
        %s123 = smul.addr %s122, 3
        %s124 = smul.addr %s123, 4
        %s125 = scalar_lea.vmem %s0, %s124
        %p126 = pneg %p37
        %p127 = pneg %p34
        %p128 = pneg %p58
        %p129 = pneg %p55
        %p130 = pneg %p84
        %p131 = pneg %p81
        %s132 = sand.u32 %s71, 1
        %s133 = scalar_lea.sflag [#allocation3], %s132
        %s134 = sand.u32 %s71, 1
        %s135 = smul.addr %s134, 16
        %s136 = scalar_lea.vmem [#allocation2], %s135
        %p137 = scmp.lt.s32.totalorder %s16, 1
        %s138 = scalar_select %p137, %s16, 1
        %s139 = smul.addr %s138, 3
        %s140 = smul.addr %s139, 4
        %s141 = scalar_lea.vmem %s0, %s140
        %v143 = vld [vmem:[%s141] sm:$0xf]
        %v144 = vld [vmem:[%s141 + $0x4] sm:$0xf]
        %v145 = vld [vmem:[%s141 + $0x8] sm:$0x1]
        %v146 = vld [vmem:[%s141] sm:$0xe]
        %v147 = vld [vmem:[%s1] sm:$0x3]
        %v148 = vld [vmem:[%s1] sm:$0xc]
        %v152 = vunpack.c.l.b16 %v143
        %v153 = vunpack.c.l.b16 %v144
        %v154 = vunpack.c.l.b16 %v145
        %v155 = vpack.c.b16 %v153, %v152
        %v156 = vpack.c.b16 %v154, %v154
        %vm157 = vsmask.f32 7424
        %v159 = vshrl.u32 %v155, 16
        %v161 = vshll.u32 %v155, 16
        %v163 = vrot.slane %v161, 1
        %v164 = vor.u32 %v159, %v163
        %v166 = vshll.u32 %v156, 16
        %v168 = vrot.slane %v166, 1
        %v169 = vsel %vm157, %v164, %v168
        %v171 = vunpack.c.l.b16 %v148
        %v172 = vpack.c.b16 %v171, %v171
        %v173 = vrot.slane %v172, 2
        %vm174 = vcmask 31744
        %v176 = vsel %vm174, %v169, 0
        %vm178 = vcmask 1041408
        %v180 = vsel %vm178, %v173, 0
        %182 = vmatprep.subr.bf16.mxu0 0
        %183 = vmatpush1.bf16.msra.mxu0 %v180
        %184 = vmatprep.subr.bf16.mxu0 0
        %185 = vmatpush1.bf16.msra.mxu0 0
        %186 = vmatprep.subr.bf16.mxu0 0
        %187 = vmatpush1.bf16.msra.mxu0 0
        %188 = vmatprep.subr.bf16.mxu0 0
        %189 = vmatpush1.bf16.msra.mxu0 0
        %190 = vmatprep.subr.bf16.mxu0 0
        %191 = vmatpush1.bf16.msra.mxu0 0
        %192 = vmatprep.subr.bf16.mxu0 0
        %193 = vmatpush1.bf16.msra.mxu0 0
        %194 = vmatprep.subr.bf16.mxu0 0
        %195 = vmatpush1.bf16.msra.mxu0 0
        %196 = vmatprep.subr.bf16.mxu0 0
        %197 = vmatpush1.bf16.msra.mxu0 0
        %198 = vmatprep.subr.bf16.mxu0 0
        %199 = vmatpush1.bf16.msra.mxu0 0
        %200 = vmatprep.subr.bf16.mxu0 0
        %201 = vmatpush1.bf16.msra.mxu0 0
        %202 = vmatprep.subr.bf16.mxu0 0
        %203 = vmatpush1.bf16.msra.mxu0 0
        %204 = vmatprep.subr.bf16.mxu0 0
        %205 = vmatpush1.bf16.msra.mxu0 0
        %206 = vmatprep.subr.bf16.mxu0 0
        %207 = vmatpush1.bf16.msra.mxu0 0
        %208 = vmatprep.subr.bf16.mxu0 0
        %209 = vmatpush1.bf16.msra.mxu0 0
        %210 = vmatprep.subr.bf16.mxu0 0
        %211 = vmatpush1.bf16.msra.mxu0 0
        %212 = vmatprep.subr.bf16.mxu0 0
        %213 = vmatpush1.bf16.msra.mxu0 0
        %214 = vmatprep.mubr.bf16.mxu0 0
        %215 = vmatmul.mubr.bf16.gmra.mrb[0].mxu0 %v176
        %v216 = vpop.f32.mrb[0].mxu0
        %v217 = vadd.f32 0.0, %v216
        %v218 = vpop.f32.mrb[0].mxu0
        %v219 = vpop.f32.mrb[0].mxu0
        %v220 = vadd.f32 0.0, %v219
        %v221 = vpop.f32.mrb[0].mxu0
        %222 = vdwg.mxu0
        %v223 = vsel %vm174, %v155, 0
        %v226 = vsel %vm178, %v147, 0
        %228 = vmatprep.subr.bf16.mxu0 0
        %229 = vmatpush1.bf16.msra.mxu0 %v226
        %230 = vmatprep.subr.bf16.mxu0 0
        %231 = vmatpush1.bf16.msra.mxu0 0
        %232 = vmatprep.subr.bf16.mxu0 0
        %233 = vmatpush1.bf16.msra.mxu0 0
        %234 = vmatprep.subr.bf16.mxu0 0
        %235 = vmatpush1.bf16.msra.mxu0 0
        %236 = vmatprep.subr.bf16.mxu0 0
        %237 = vmatpush1.bf16.msra.mxu0 0
        %238 = vmatprep.subr.bf16.mxu0 0
        %239 = vmatpush1.bf16.msra.mxu0 0
        %240 = vmatprep.subr.bf16.mxu0 0
        %241 = vmatpush1.bf16.msra.mxu0 0
        %242 = vmatprep.subr.bf16.mxu0 0
        %243 = vmatpush1.bf16.msra.mxu0 0
        %244 = vmatprep.subr.bf16.mxu0 0
        %245 = vmatpush1.bf16.msra.mxu0 0
        %246 = vmatprep.subr.bf16.mxu0 0
        %247 = vmatpush1.bf16.msra.mxu0 0
        %248 = vmatprep.subr.bf16.mxu0 0
        %249 = vmatpush1.bf16.msra.mxu0 0
        %250 = vmatprep.subr.bf16.mxu0 0
        %251 = vmatpush1.bf16.msra.mxu0 0
        %252 = vmatprep.subr.bf16.mxu0 0
        %253 = vmatpush1.bf16.msra.mxu0 0
        %254 = vmatprep.subr.bf16.mxu0 0
        %255 = vmatpush1.bf16.msra.mxu0 0
        %256 = vmatprep.subr.bf16.mxu0 0
        %257 = vmatpush1.bf16.msra.mxu0 0
        %258 = vmatprep.subr.bf16.mxu0 0
        %259 = vmatpush1.bf16.msra.mxu0 0
        %260 = vmatprep.mubr.bf16.mxu0 0
        %261 = vmatmul.mubr.bf16.gmra.mrb[0].mxu0 %v223
        %v262 = vpop.f32.mrb[0].mxu0
        %v263 = vadd.f32 %v217, %v262
        %v264 = vpop.f32.mrb[0].mxu0
        %v265 = vpop.f32.mrb[0].mxu0
        %v266 = vadd.f32 %v220, %v265
        %v267 = vpop.f32.mrb[0].mxu0
        %268 = vdwg.mxu0
        %v269 = vld [vmem:[%s1 + $0x4] sm:$0x3]
        %v271 = vunpack.c.l.b16 %v146
        %v272 = vpack.c.b16 %v153, %v271
        %vm273 = vcmask 1046528
        %v274 = vrot.slane %v272, 1
        %v275 = vrot.slane %v156, 1
        %v276 = vsel %vm273, %v274, %v275
        %v278 = vsel %vm174, %v276, 0
        %v281 = vsel %vm178, %v269, 0
        %283 = vmatprep.subr.bf16.mxu0 0
        %284 = vmatpush1.bf16.msra.mxu0 %v281
        %285 = vmatprep.subr.bf16.mxu0 0
        %286 = vmatpush1.bf16.msra.mxu0 0
        %287 = vmatprep.subr.bf16.mxu0 0
        %288 = vmatpush1.bf16.msra.mxu0 0
        %289 = vmatprep.subr.bf16.mxu0 0
        %290 = vmatpush1.bf16.msra.mxu0 0
        %291 = vmatprep.subr.bf16.mxu0 0
        %292 = vmatpush1.bf16.msra.mxu0 0
        %293 = vmatprep.subr.bf16.mxu0 0
        %294 = vmatpush1.bf16.msra.mxu0 0
        %295 = vmatprep.subr.bf16.mxu0 0
        %296 = vmatpush1.bf16.msra.mxu0 0
        %297 = vmatprep.subr.bf16.mxu0 0
        %298 = vmatpush1.bf16.msra.mxu0 0
        %299 = vmatprep.subr.bf16.mxu0 0
        %300 = vmatpush1.bf16.msra.mxu0 0
        %301 = vmatprep.subr.bf16.mxu0 0
        %302 = vmatpush1.bf16.msra.mxu0 0
        %303 = vmatprep.subr.bf16.mxu0 0
        %304 = vmatpush1.bf16.msra.mxu0 0
        %305 = vmatprep.subr.bf16.mxu0 0
        %306 = vmatpush1.bf16.msra.mxu0 0
        %307 = vmatprep.subr.bf16.mxu0 0
        %308 = vmatpush1.bf16.msra.mxu0 0
        %309 = vmatprep.subr.bf16.mxu0 0
        %310 = vmatpush1.bf16.msra.mxu0 0
        %311 = vmatprep.subr.bf16.mxu0 0
        %312 = vmatpush1.bf16.msra.mxu0 0
        %313 = vmatprep.subr.bf16.mxu0 0
        %314 = vmatpush1.bf16.msra.mxu0 0
        %315 = vmatprep.mubr.bf16.mxu0 0
        %316 = vmatmul.mubr.bf16.gmra.mrb[0].mxu0 %v278
        %v317 = vpop.f32.mrb[0].mxu0
        %v318 = vadd.f32 0.0, %v317
        %v319 = vpop.f32.mrb[0].mxu0
        %v320 = vpop.f32.mrb[0].mxu0
        %v321 = vadd.f32 0.0, %v320
        %v322 = vpop.f32.mrb[0].mxu0
        %323 = vdwg.mxu0
        %v324 = vadd.f32 %v263, %v318
        %v325 = vadd.f32 %v266, %v321
        %326 = vst [vmem:[%s136] sm:$0xff] %v324
        %327 = vst [vmem:[%s136 + $0x8] sm:$0xff] %v325
        %s328 = sand.u32 %s71, 1
        %s329 = scalar_lea.sflag [#allocation3], %s328
        %s330 = sand.u32 %s71, 1
        %s331 = smul.addr %s330, 16
        %s332 = scalar_lea.vmem [#allocation2], %s331
        // Predicated region
        $region29: #{token_embedding_forward.1} parent=27 // pred_check
          %p333 = pneg %p81
        $region30: #{token_embedding_forward.1} parent=27 // pred_check_branch
          %335 = sbr.rel (%p333) target = $region32
        $region31: #{token_embedding_forward.1} parent=27 // pred_region
          %s337 = ssub.s32 256, 256
          %338 = vsyncadd %s329, %s337
          %s339 = smul.addr %s16, 2
          %s340 = smul.addr %s339, 128
          %s341 = scalar_lea.hbm %s2, %s340
          %s342 = sshll.u32 %s332, 4
          %s343 = int_to_ptr.vmem [resolvable:$true] %s342
          %348 = dma.vmem_to_hbm [thread:$0]  %s343, 256, %s341, %s329, 128, 128, 8
        $region32: #{token_embedding_forward.1} parent=27 // pred_fallthru
          _
      $region28: #{token_embedding_forward.1} parent=5 // pred_fallthru
        _
      %p349 = scmp.le.s32.totalorder 2, %s11
      // Predicated region
      $region33: #{token_embedding_forward.1} parent=5 // pred_check
        %p350 = pneg %p349
      $region34: #{token_embedding_forward.1} parent=5 // pred_check_branch
        %352 = sbr.rel (%p350) target = $region36
      $region35: #{token_embedding_forward.1} parent=5 // pred_region
        %s353 = ssub.s32 %s11, 2
        // Predicated region
        $region37: #{token_embedding_forward.1} parent=35 // pred_check
          %p354 = pneg %p87
        $region38: #{token_embedding_forward.1} parent=35 // pred_check_branch
          %356 = sbr.rel (%p354) target = $region40
        $region39: #{token_embedding_forward.1} parent=35 // pred_region
          %s357 = sand.u32 %s72, 1
          %s358 = scalar_lea.sflag [#allocation3], %s357
          %s359 = sand.u32 %s72, 1
          %s360 = smul.addr %s359, 16
          %s361 = scalar_lea.vmem [#allocation2], %s360
          %362 = dma.done %s358, 256
        $region40: #{token_embedding_forward.1} parent=35 // pred_fallthru
          _
      $region36: #{token_embedding_forward.1} parent=5 // pred_fallthru
        _
    $region6: #{token_embedding_forward.1} parent=1 // loop_footer
      %s15 = sadd.s32 1, %s11
    $region7: #{token_embedding_forward.1} parent=1 // loop_footer_branch
      %10 = sbr.rel target = $region3
    $region8: #{token_embedding_forward.1} parent=1 // loop_exit
      _
    %363 = vsyncpa [#allocation3], 1
    %s364 = scalar_lea.sflag [#allocation3], 1
    %365 = vsyncpa %s364, 1

</llo_original>
